<compile_context>
chip_gen: v7x
topology: tpu7x:2x2x1
jax: 0.10.0
libtpu: 0.0.40
codegen_flags: <defaults>
</compile_context>

<pallas_src>
import jax
import jax.numpy as jnp
import numpy as np
from jax.experimental import pallas as pl
from jax.experimental.pallas import tpu as pltpu


def _round_up(x, m):
    return ((x + m - 1) // m) * m


def _vmem_budgets():
    """Generation-aware (vmem_limit_bytes, working-set target) in bytes."""
    try:
        cap = int(pltpu.get_tpu_info().vmem_capacity_bytes)
    except Exception:
        cap = 64 << 20            # assume smallest (v7x-class) if query fails
    limit = min(cap // 2, 64 << 20)   # 64 MiB on v5e/v6e, 32 MiB on v7x
    ws = min(cap // 4, 32 << 20)      # 32 MiB on v5e/v6e, 16 MiB on v7x
    return limit, ws


def _rfft2_basis(H, W, Cpad):
    """Fused 2-D real-DFT basis.

    Rows index the flattened image pixel (h*W + w); columns pack all (k, c)
    real parts, then all imaginary parts, zero-padded to Cpad lanes.
    torch norm='backward': exp(-2*pi*i*(k*h/H + c*w/W)), no scaling.
    """
    Wc = W // 2 + 1
    h = np.arange(H)[:, None, None, None]
    w = np.arange(W)[None, :, None, None]
    k = np.arange(H)[None, None, :, None]
    c = np.arange(Wc)[None, None, None, :]
    ang = -2.0 * np.pi * (h * k / H + w * c / W)            # (H, W, H, Wc)
    hwc = H * Wc
    basis = np.zeros((H * W, Cpad), dtype=np.float32)
    basis[:, :hwc] = np.cos(ang).reshape(H * W, hwc)
    basis[:, hwc:2 * hwc] = np.sin(ang).reshape(H * W, hwc)
    return basis


def _fft_l1_kernel(p_ref, t_ref, b_ref, out_ref):
    # Difference once (DFT linearity): FFT(p) - FFT(t) == FFT(p - t).
    d = p_ref[...].astype(jnp.float32) - t_ref[...].astype(jnp.float32)
    d = d.astype(jnp.bfloat16)                                   # (TN, H*W)
    # Fused 2-D real DFT: one big bf16 MXU matmul with f32 accumulation.
    spec = jnp.dot(d, b_ref[...],
                   preferred_element_type=jnp.float32)           # (TN, Cpad)
    mag = jnp.abs(spec)
    tn, cp = mag.shape
    # Fold image rows down to 8 sublanes -> lane-dense (8, Cpad) partial block.
    out_ref[...] = jnp.sum(mag.reshape(tn // 8, 8, cp), axis=0)


def _build_pallas_fn(G, TN, HW, Cpad, vmem_limit, single_buffer_basis):
    if single_buffer_basis:
        # Constant block index -> no point double-buffering the DFT basis.
        basis_spec = pl.BlockSpec((HW, Cpad), lambda i: (0, 0),
                                  pipeline_mode=pl.Buffered(1))
    else:
        basis_spec = pl.BlockSpec((HW, Cpad), lambda i: (0, 0))
    return pl.pallas_call(
        _fft_l1_kernel,
        out_shape=jax.ShapeDtypeStruct((G * 8, Cpad), jnp.float32),
        grid_spec=pltpu.PrefetchScalarGridSpec(
            num_scalar_prefetch=0,
            grid=(G,),
            in_specs=[
                pl.BlockSpec((TN, HW), lambda i: (i, 0)),   # pred chunk
                pl.BlockSpec((TN, HW), lambda i: (i, 0)),   # target chunk
                basis_spec,                                  # fused DFT basis
            ],
            out_specs=pl.BlockSpec((8, Cpad), lambda i: (i, 0)),
        ),
        compiler_params=pltpu.CompilerParams(
            dimension_semantics=("parallel",),   # independent per-step partials
            vmem_limit_bytes=vmem_limit,
        ),
    )


def fft_loss(pred, target, loss_weight=1.0, reduction='mean'):
    """pred/target: (B, C, H, W) real arrays (NCHW, same as the torch module)."""
    assert pred.shape == target.shape
    B, C, H, W = pred.shape
    N = B * C
    HW = H * W
    Wc = W // 2 + 1
    Cpad = _round_up(2 * H * Wc, 128)      # lane-dense packed (re|im) spectrum

    basis_bytes = HW * Cpad * 2            # bf16
    if basis_bytes > (16 << 20):
        # TODO(synk): two-stage DFT / true FFT path for large spatial sizes.
        raise NotImplementedError("fused dense-DFT basis too large for H, W")

    vmem_limit, ws_budget = _vmem_budgets()

    # Per-image kernel working set: 2 inputs x 2 pipeline buffers (f32) +
    # bf16 diff + f32 spectrum + f32 magnitude.
    per_img = 4 * 4 * HW + 2 * HW + 2 * 4 * Cpad
    ws_avail = max(ws_budget - 2 * basis_bytes, per_img * 8)
    tn = max(8, (ws_avail // per_img) // 8 * 8)
    tn = min(tn, 1024)

    N8 = _round_up(N, 8)
    tn = min(tn, N8)
    # Keep >= 2 grid steps when there is enough work so both TensorCores stay
    # busy on multi-core chips; on 1-TC chips the extra step is ~0.35 us.
    if N8 >= 16:
        tn = min(tn, _round_up((N8 + 1) // 2, 8))
    tn = max(8, (tn // 8) * 8)

    N_pad = _round_up(N, tn)
    G = N_pad // tn

    pred2 = pred.reshape(N, HW)
    targ2 = target.reshape(N, HW)
    if N_pad != N:
        # Zero-padded images have d = 0 -> contribute 0 to the sum.
        pad = ((0, N_pad - N), (0, 0))
        pred2 = jnp.pad(pred2, pad)
        targ2 = jnp.pad(targ2, pad)

    basis = jnp.asarray(_rfft2_basis(H, W, Cpad), dtype=jnp.bfloat16)

    partials = None
    err = None
    for single_buffer_basis in (True, False):
        try:
            fn = _build_pallas_fn(G, tn, HW, Cpad, vmem_limit,
                                  single_buffer_basis)
            partials = fn(pred2, targ2, basis)
            break
        except Exception as e:   # older JAX without pipeline_mode / Buffered(1)
            err = e
            partials = None
    if partials is None:
        raise err

    total = jnp.sum(partials)
    if reduction == 'mean':
        # Element count of the stacked (real, imag) tensor: N * H * Wc * 2.
        loss = total / jnp.float32(N * H * Wc * 2)
    elif reduction == 'sum':
        loss = total
    else:
        raise ValueError(f"unsupported reduction: {reduction}")
    return loss_weight * loss


if __name__ == "__main__":
    key = jax.random.PRNGKey(0)
    k1, k2 = jax.random.split(key)
    B, C, H, W = 2, 4, 16, 16
    pred = jax.random.normal(k1, (B, C, H, W), dtype=jnp.float32)
    target = jax.random.normal(k2, (B, C, H, W), dtype=jnp.float32)

    loss = fft_loss(pred, target, loss_weight=1.0, reduction='mean')
    loss = jax.block_until_ready(loss)

    # Reference check against jnp.fft.rfft2 (same semantics as torch.fft.rfft2).
    p_fft = jnp.fft.rfft2(pred)
    t_fft = jnp.fft.rfft2(target)
    p_st = jnp.stack([p_fft.real, p_fft.imag], axis=-1)
    t_st = jnp.stack([t_fft.real, t_fft.imag], axis=-1)
    ref = jnp.mean(jnp.abs(p_st - t_st))
    # bf16 MXU operands (f32 accumulation) -> relaxed tolerance vs f32 reference.
    np.testing.assert_allclose(np.asarray(loss), np.asarray(ref),
                               rtol=1e-2, atol=1e-2)

    print("KERNEL_OK")
</pallas_src>

<mosaic_0001>
module attributes {stable_mosaic.version = 11 : i64} {
  func.func @_fft_l1_kernel(%arg0: i32, %arg1: memref<8x256xf32, #tpu.memory_space<vmem>>, %arg2: memref<8x256xf32, #tpu.memory_space<vmem>>, %arg3: memref<256x384xbf16, #tpu.memory_space<vmem>>, %arg4: memref<8x384xf32, #tpu.memory_space<vmem>>) attributes {dimension_semantics = [#tpu.dimension_semantics<parallel>], iteration_bounds = array<i64: 1>, scalar_prefetch = 0 : i64, scratch_operands = 0 : i64, tpu.core_type = #tpu.core_type<tc>, window_params = [{transform_indices = @transform_0, window_bounds = array<i64: 8, 256>}, {transform_indices = @transform_1, window_bounds = array<i64: 8, 256>}, {pipeline_mode = #tpu.pipeline_mode<synchronous>, transform_indices = @transform_2, window_bounds = array<i64: 256, 384>}, {transform_indices = @transform_3, window_bounds = array<i64: 8, 384>}]} {
    %c0 = arith.constant 0 : index
    %c0_0 = arith.constant 0 : index
    %0 = vector.load %arg1[%c0, %c0_0] : memref<8x256xf32, #tpu.memory_space<vmem>>, vector<8x256xf32>
    %c0_1 = arith.constant 0 : index
    %c0_2 = arith.constant 0 : index
    %1 = vector.load %arg2[%c0_1, %c0_2] : memref<8x256xf32, #tpu.memory_space<vmem>>, vector<8x256xf32>
    %2 = arith.subf %0, %1 : vector<8x256xf32>
    %3 = arith.truncf %2 : vector<8x256xf32> to vector<8x256xbf16>
    %c0_3 = arith.constant 0 : index
    %c0_4 = arith.constant 0 : index
    %4 = vector.load %arg3[%c0_3, %c0_4] : memref<256x384xbf16, #tpu.memory_space<vmem>>, vector<256x384xbf16>
    %cst = arith.constant dense<0.000000e+00> : vector<8x384xf32>
    %5 = tpu.matmul %3, %4, %cst {dimension_numbers = #tpu.dot_dimension_numbers<[1], [0], [0], [1], [0, 0, 1, 1], [], []>} : vector<8x256xbf16>, vector<256x384xbf16>, vector<8x384xf32> -> vector<8x384xf32>
    %6 = math.absf %5 : vector<8x384xf32>
    %7 = vector.shape_cast %6 : vector<8x384xf32> to vector<1x8x384xf32>
    %cst_5 = arith.constant dense<0.000000e+00> : vector<8x384xf32>
    %8 = vector.multi_reduction <add>, %7, %cst_5 [0] : vector<1x8x384xf32> to vector<8x384xf32>
    %c0_6 = arith.constant 0 : index
    %c0_7 = arith.constant 0 : index
    %9 = vector.load %arg4[%c0_6, %c0_7] : memref<8x384xf32, #tpu.memory_space<vmem>>, vector<8x384xf32>
    tpu.vector_store %arg4[%c0_6, %c0_7], %8 {strides = array<i32>} : memref<8x384xf32, #tpu.memory_space<vmem>>, vector<8x384xf32>,
    return
  }
  func.func @transform_0(%arg0: i32) -> (i32, i32) {
    %c0_i32 = arith.constant 0 : i32
    %c0_i32_0 = arith.constant 0 : i32
    return %arg0, %c0_i32 : i32, i32
  }
  func.func @transform_1(%arg0: i32) -> (i32, i32) {
    %c0_i32 = arith.constant 0 : i32
    %c0_i32_0 = arith.constant 0 : i32
    return %arg0, %c0_i32 : i32, i32
  }
  func.func @transform_2(%arg0: i32) -> (i32, i32) {
    %c0_i32 = arith.constant 0 : i32
    %c0_i32_0 = arith.constant 0 : i32
    %c0_i32_1 = arith.constant 0 : i32
    return %c0_i32, %c0_i32_0 : i32, i32
  }
  func.func @transform_3(%arg0: i32) -> (i32, i32) {
    %c0_i32 = arith.constant 0 : i32
    %c0_i32_0 = arith.constant 0 : i32
    return %arg0, %c0_i32 : i32, i32
  }
}

module attributes {stable_mosaic.version = 11 : i64} {
  func.func @_fft_l1_kernel(%arg0: i32, %arg1: memref<8x256xf32, #tpu.memory_space<vmem>>, %arg2: memref<8x256xf32, #tpu.memory_space<vmem>>, %arg3: memref<256x384xbf16, #tpu.memory_space<vmem>>, %arg4: memref<8x384xf32, #tpu.memory_space<vmem>>) attributes {dimension_semantics = [#tpu.dimension_semantics<parallel>], iteration_bounds = array<i64: 1>, scalar_prefetch = 0 : i64, scratch_operands = 0 : i64, tpu.core_type = #tpu.core_type<tc>, window_params = [{transform_indices = @transform_0, window_bounds = array<i64: 8, 256>}, {transform_indices = @transform_1, window_bounds = array<i64: 8, 256>}, {pipeline_mode = #tpu.pipeline_mode<synchronous>, transform_indices = @transform_2, window_bounds = array<i64: 256, 384>}, {transform_indices = @transform_3, window_bounds = array<i64: 8, 384>}]} {
    %c0 = arith.constant 0 : index
    %c0_0 = arith.constant 0 : index
    %0 = vector.load %arg1[%c0, %c0_0] : memref<8x256xf32, #tpu.memory_space<vmem>>, vector<8x256xf32>
    %c0_1 = arith.constant 0 : index
    %c0_2 = arith.constant 0 : index
    %1 = vector.load %arg2[%c0_1, %c0_2] : memref<8x256xf32, #tpu.memory_space<vmem>>, vector<8x256xf32>
    %2 = arith.subf %0, %1 : vector<8x256xf32>
    %3 = arith.truncf %2 : vector<8x256xf32> to vector<8x256xbf16>
    %c0_3 = arith.constant 0 : index
    %c0_4 = arith.constant 0 : index
    %4 = vector.load %arg3[%c0_3, %c0_4] : memref<256x384xbf16, #tpu.memory_space<vmem>>, vector<256x384xbf16>
    %cst = arith.constant dense<0.000000e+00> : vector<8x384xf32>
    %5 = tpu.matmul %3, %4, %cst {dimension_numbers = #tpu.dot_dimension_numbers<[1], [0], [0], [1], [0, 0, 1, 1], [], []>} : vector<8x256xbf16>, vector<256x384xbf16>, vector<8x384xf32> -> vector<8x384xf32>
    %6 = math.absf %5 : vector<8x384xf32>
    %7 = vector.shape_cast %6 : vector<8x384xf32> to vector<1x8x384xf32>
    %cst_5 = arith.constant dense<0.000000e+00> : vector<8x384xf32>
    %8 = vector.multi_reduction <add>, %7, %cst_5 [0] : vector<1x8x384xf32> to vector<8x384xf32>
    %c0_6 = arith.constant 0 : index
    %c0_7 = arith.constant 0 : index
    %9 = vector.load %arg4[%c0_6, %c0_7] : memref<8x384xf32, #tpu.memory_space<vmem>>, vector<8x384xf32>
    tpu.vector_store %arg4[%c0_6, %c0_7], %8 {strides = array<i32>} : memref<8x384xf32, #tpu.memory_space<vmem>>, vector<8x384xf32>,
    return
  }
  func.func @transform_0(%arg0: i32) -> (i32, i32) {
    %c0_i32 = arith.constant 0 : i32
    %c0_i32_0 = arith.constant 0 : i32
    return %arg0, %c0_i32 : i32, i32
  }
  func.func @transform_1(%arg0: i32) -> (i32, i32) {
    %c0_i32 = arith.constant 0 : i32
    %c0_i32_0 = arith.constant 0 : i32
    return %arg0, %c0_i32 : i32, i32
  }
  func.func @transform_2(%arg0: i32) -> (i32, i32) {
    %c0_i32 = arith.constant 0 : i32
    %c0_i32_0 = arith.constant 0 : i32
    %c0_i32_1 = arith.constant 0 : i32
    return %c0_i32, %c0_i32_0 : i32, i32
  }
  func.func @transform_3(%arg0: i32) -> (i32, i32) {
    %c0_i32 = arith.constant 0 : i32
    %c0_i32_0 = arith.constant 0 : i32
    return %arg0, %c0_i32 : i32, i32
  }
}

</mosaic_0001>

<llo_original>
// kernel: tpu_custom_call.1
$region0: #{tpu_custom_call.1}
  #allocation0 [shape = 'u32[]', space=smem, size = 0x4, offset = 0x4, fixed_abs, tag = 'smem constant byte address 0x4 - core index']
  #allocation1 [shape = 'u32[144,128]{1,0:T(1,128)}', space=vmem, size = 0x12000, scoped, tag = 'internal scratch']
  %s0 = inlined_call_operand.hbm [shape: f32[8,256], index: 0, kind: input, shape index: {}]
  %s1 = inlined_call_operand.hbm [shape: f32[8,256], index: 1, kind: input, shape index: {}]
  %s2 = inlined_call_operand.hbm [shape: bf16[256,384], index: 2, kind: input, shape index: {}]
  %s3 = inlined_call_operand.hbm [shape: f32[8,384], index: 3, kind: output, shape index: {}]
  %s4 = sld [smem:[#allocation0]]
  $region34: #{tpu_custom_call.1} parent=0
    _
  %s6 = ssub.s32 1, %s4
  %s7 = scalar_select 0, %s6, %s4
  $region1: #{tpu_custom_call.1} parent=0
    #allocation2 [shape = 'u8[8192]{0}', space=vmem, size = 0x2000, scoped, tag = 'input window, operand 0, single buffered']
    #allocation3 [shape = 's32[1]{0}', space=sflag, size = 0x4, scoped, tag = 'scoped memory for tpu_custom_call.1']
    #allocation4 [shape = 's32[1]{0}', space=sflag, size = 0x4, scoped, tag = 'scoped memory for tpu_custom_call.1']
    #allocation5 [shape = 'u8[8192]{0}', space=vmem, size = 0x2000, scoped, tag = 'input window, operand 1, single buffered']
    #allocation6 [shape = 's32[1]{0}', space=sflag, size = 0x4, scoped, tag = 'scoped memory for tpu_custom_call.1']
    #allocation7 [shape = 'u8[196608]{0}', space=vmem, size = 0x30000, scoped, tag = 'input window, operand 2, single buffered']
    #allocation8 [shape = 'u8[12288]{0}', space=vmem, size = 0x3000, scoped, tag = 'output window, operand 0, single buffered']
    %8 = vsyncpa [#allocation3], 0
    %9 = vsyncpa [#allocation6], 0
    %10 = vsyncpa [#allocation4], 0
    // Predicated region
    $region2: #{tpu_custom_call.1} parent=1 // pred_check
      _
    $region3: #{tpu_custom_call.1} parent=1 // pred_check_branch
      %12 = sbr.rel (0) target = $region5
    $region4: #{tpu_custom_call.1} parent=1 // pred_region
      %s14 = ssub.s32 256, 256
      %15 = vsyncadd [#allocation3], %s14
      %s17 = sshll.u32 [#allocation2], 4
      %s18 = int_to_ptr.vmem [resolvable:$true] %s17
      %20 = dma.hbm_to_vmem [thread:$0]  %s0, 256, %s18, [#allocation3]
    $region5: #{tpu_custom_call.1} parent=1 // pred_fallthru
      _
    // Predicated region
    $region6: #{tpu_custom_call.1} parent=1 // pred_check
      _
    $region7: #{tpu_custom_call.1} parent=1 // pred_check_branch
      %22 = sbr.rel (0) target = $region9
    $region8: #{tpu_custom_call.1} parent=1 // pred_region
      %s24 = ssub.s32 256, 256
      %25 = vsyncadd [#allocation6], %s24
      %s27 = sshll.u32 [#allocation5], 4
      %s28 = int_to_ptr.vmem [resolvable:$true] %s27
      %30 = dma.hbm_to_vmem [thread:$0]  %s1, 256, %s28, [#allocation6]
    $region9: #{tpu_custom_call.1} parent=1 // pred_fallthru
      _
    // Predicated region
    $region10: #{tpu_custom_call.1} parent=1 // pred_check
      _
    $region11: #{tpu_custom_call.1} parent=1 // pred_check_branch
      %32 = sbr.rel (0) target = $region13
    $region12: #{tpu_custom_call.1} parent=1 // pred_region
      %s34 = ssub.s32 6144, 6144
      %35 = vsyncadd [#allocation6], %s34
      %s36 = sshll.u32 [#allocation7], 4
      %s37 = int_to_ptr.vmem [resolvable:$true] %s36
      %42 = dma.hbm_to_vmem [thread:$0]  %s2, 6144, %s37, [#allocation6], 192, 192, 12
    $region13: #{tpu_custom_call.1} parent=1 // pred_fallthru
      _
    // Predicated region
    $region14: #{tpu_custom_call.1} parent=1 // pred_check
      _
    $region15: #{tpu_custom_call.1} parent=1 // pred_check_branch
      %44 = sbr.rel (0) target = $region17
    $region16: #{tpu_custom_call.1} parent=1 // pred_region
      %45 = dma.done [#allocation3], 256
    $region17: #{tpu_custom_call.1} parent=1 // pred_fallthru
      _
    // Predicated region
    $region18: #{tpu_custom_call.1} parent=1 // pred_check
      _
    $region19: #{tpu_custom_call.1} parent=1 // pred_check_branch
      %47 = sbr.rel (0) target = $region21
    $region20: #{tpu_custom_call.1} parent=1 // pred_region
      %48 = dma.done [#allocation6], 256
    $region21: #{tpu_custom_call.1} parent=1 // pred_fallthru
      _
    // Predicated region
    $region22: #{tpu_custom_call.1} parent=1 // pred_check
      _
    $region23: #{tpu_custom_call.1} parent=1 // pred_check_branch
      %50 = sbr.rel (0) target = $region25
    $region24: #{tpu_custom_call.1} parent=1 // pred_region
      %51 = dma.done [#allocation6], 6144
    $region25: #{tpu_custom_call.1} parent=1 // pred_fallthru
      _
    %v53 = vld [vmem:[#allocation2] sm:$0xff]
    %v54 = vld [vmem:[#allocation2 + $0x8] sm:$0xff]
    %v55 = vld [vmem:[#allocation5] sm:$0xff]
    %v56 = vld [vmem:[#allocation5 + $0x8] sm:$0xff]
    %v57 = vsub.f32 %v53, %v55
    %v58 = vsub.f32 %v54, %v56
    %v59 = vpack.c.bf16 %v57, %v57
    %v60 = vpack.c.bf16 %v58, %v58
    %v61 = vld [vmem:[#allocation7] sm:$0xff]
    %v62 = vld [vmem:[#allocation7 + $0x8] sm:$0xf]
    %v63 = vld [vmem:[#allocation7 + $0xc] sm:$0xff]
    %v64 = vld [vmem:[#allocation7 + $0x14] sm:$0xf]
    %v65 = vld [vmem:[#allocation7 + $0x18] sm:$0xff]
    %v66 = vld [vmem:[#allocation7 + $0x20] sm:$0xf]
    %v67 = vld [vmem:[#allocation7 + $0x24] sm:$0xff]
    %v68 = vld [vmem:[#allocation7 + $0x2c] sm:$0xf]
    %v69 = vld [vmem:[#allocation7 + $0x30] sm:$0xff]
    %v70 = vld [vmem:[#allocation7 + $0x38] sm:$0xf]
    %v71 = vld [vmem:[#allocation7 + $0x3c] sm:$0xff]
    %v72 = vld [vmem:[#allocation7 + $0x44] sm:$0xf]
    %v73 = vld [vmem:[#allocation7 + $0x48] sm:$0xff]
    %v74 = vld [vmem:[#allocation7 + $0x50] sm:$0xf]
    %v75 = vld [vmem:[#allocation7 + $0x54] sm:$0xff]
    %v76 = vld [vmem:[#allocation7 + $0x5c] sm:$0xf]
    %v77 = vld [vmem:[#allocation7 + $0x60] sm:$0xff]
    %v78 = vld [vmem:[#allocation7 + $0x68] sm:$0xf]
    %v79 = vld [vmem:[#allocation7 + $0x6c] sm:$0xff]
    %v80 = vld [vmem:[#allocation7 + $0x74] sm:$0xf]
    %v81 = vld [vmem:[#allocation7 + $0x78] sm:$0xff]
    %v82 = vld [vmem:[#allocation7 + $0x80] sm:$0xf]
    %v83 = vld [vmem:[#allocation7 + $0x84] sm:$0xff]
    %v84 = vld [vmem:[#allocation7 + $0x8c] sm:$0xf]
    %v85 = vld [vmem:[#allocation7 + $0x90] sm:$0xff]
    %v86 = vld [vmem:[#allocation7 + $0x98] sm:$0xf]
    %v87 = vld [vmem:[#allocation7 + $0x9c] sm:$0xff]
    %v88 = vld [vmem:[#allocation7 + $0xa4] sm:$0xf]
    %v89 = vld [vmem:[#allocation7 + $0xa8] sm:$0xff]
    %v90 = vld [vmem:[#allocation7 + $0xb0] sm:$0xf]
    %v91 = vld [vmem:[#allocation7 + $0xb4] sm:$0xff]
    %v92 = vld [vmem:[#allocation7 + $0xbc] sm:$0xf]
    %v93 = vld [vmem:[#allocation7 + $0xc0] sm:$0xff]
    %v94 = vld [vmem:[#allocation7 + $0xc8] sm:$0xf]
    %v95 = vld [vmem:[#allocation7 + $0xcc] sm:$0xff]
    %v96 = vld [vmem:[#allocation7 + $0xd4] sm:$0xf]
    %v97 = vld [vmem:[#allocation7 + $0xd8] sm:$0xff]
    %v98 = vld [vmem:[#allocation7 + $0xe0] sm:$0xf]
    %v99 = vld [vmem:[#allocation7 + $0xe4] sm:$0xff]
    %v100 = vld [vmem:[#allocation7 + $0xec] sm:$0xf]
    %v101 = vld [vmem:[#allocation7 + $0xf0] sm:$0xff]
    %v102 = vld [vmem:[#allocation7 + $0xf8] sm:$0xf]
    %v103 = vld [vmem:[#allocation7 + $0xfc] sm:$0xff]
    %v104 = vld [vmem:[#allocation7 + $0x104] sm:$0xf]
    %v105 = vld [vmem:[#allocation7 + $0x108] sm:$0xff]
    %v106 = vld [vmem:[#allocation7 + $0x110] sm:$0xf]
    %v107 = vld [vmem:[#allocation7 + $0x114] sm:$0xff]
    %v108 = vld [vmem:[#allocation7 + $0x11c] sm:$0xf]
    %v109 = vld [vmem:[#allocation7 + $0x120] sm:$0xff]
    %v110 = vld [vmem:[#allocation7 + $0x128] sm:$0xf]
    %v111 = vld [vmem:[#allocation7 + $0x12c] sm:$0xff]
    %v112 = vld [vmem:[#allocation7 + $0x134] sm:$0xf]
    %v113 = vld [vmem:[#allocation7 + $0x138] sm:$0xff]
    %v114 = vld [vmem:[#allocation7 + $0x140] sm:$0xf]
    %v115 = vld [vmem:[#allocation7 + $0x144] sm:$0xff]
    %v116 = vld [vmem:[#allocation7 + $0x14c] sm:$0xf]
    %v117 = vld [vmem:[#allocation7 + $0x150] sm:$0xff]
    %v118 = vld [vmem:[#allocation7 + $0x158] sm:$0xf]
    %v119 = vld [vmem:[#allocation7 + $0x15c] sm:$0xff]
    %v120 = vld [vmem:[#allocation7 + $0x164] sm:$0xf]
    %v121 = vld [vmem:[#allocation7 + $0x168] sm:$0xff]
    %v122 = vld [vmem:[#allocation7 + $0x170] sm:$0xf]
    %v123 = vld [vmem:[#allocation7 + $0x174] sm:$0xff]
    %v124 = vld [vmem:[#allocation7 + $0x17c] sm:$0xf]
    %v189 = vunpack.c.l.b16 %v61
    %v190 = vunpack.c.h.b16 %v61
    %v191 = vunpack.c.l.b16 %v62
    %v192 = vunpack.c.l.b16 %v63
    %v193 = vunpack.c.h.b16 %v63
    %v194 = vunpack.c.l.b16 %v64
    %v195 = vunpack.c.l.b16 %v65
    %v196 = vunpack.c.h.b16 %v65
    %v197 = vunpack.c.l.b16 %v66
    %v198 = vunpack.c.l.b16 %v67
    %v199 = vunpack.c.h.b16 %v67
    %v200 = vunpack.c.l.b16 %v68
    %v201 = vunpack.c.l.b16 %v69
    %v202 = vunpack.c.h.b16 %v69
    %v203 = vunpack.c.l.b16 %v70
    %v204 = vunpack.c.l.b16 %v71
    %v205 = vunpack.c.h.b16 %v71
    %v206 = vunpack.c.l.b16 %v72
    %v207 = vunpack.c.l.b16 %v73
    %v208 = vunpack.c.h.b16 %v73
    %v209 = vunpack.c.l.b16 %v74
    %v210 = vunpack.c.l.b16 %v75
    %v211 = vunpack.c.h.b16 %v75
    %v212 = vunpack.c.l.b16 %v76
    %v213 = vunpack.c.l.b16 %v77
    %v214 = vunpack.c.h.b16 %v77
    %v215 = vunpack.c.l.b16 %v78
    %v216 = vunpack.c.l.b16 %v79
    %v217 = vunpack.c.h.b16 %v79
    %v218 = vunpack.c.l.b16 %v80
    %v219 = vunpack.c.l.b16 %v81
    %v220 = vunpack.c.h.b16 %v81
    %v221 = vunpack.c.l.b16 %v82
    %v222 = vunpack.c.l.b16 %v83
    %v223 = vunpack.c.h.b16 %v83
    %v224 = vunpack.c.l.b16 %v84
    %v225 = vunpack.c.l.b16 %v85
    %v226 = vunpack.c.h.b16 %v85
    %v227 = vunpack.c.l.b16 %v86
    %v228 = vunpack.c.l.b16 %v87
    %v229 = vunpack.c.h.b16 %v87
    %v230 = vunpack.c.l.b16 %v88
    %v231 = vunpack.c.l.b16 %v89
    %v232 = vunpack.c.h.b16 %v89
    %v233 = vunpack.c.l.b16 %v90
    %v234 = vunpack.c.l.b16 %v91
    %v235 = vunpack.c.h.b16 %v91
    %v236 = vunpack.c.l.b16 %v92
    %v237 = vunpack.c.l.b16 %v93
    %v238 = vunpack.c.h.b16 %v93
    %v239 = vunpack.c.l.b16 %v94
    %v240 = vunpack.c.l.b16 %v95
    %v241 = vunpack.c.h.b16 %v95
    %v242 = vunpack.c.l.b16 %v96
    %v243 = vunpack.c.l.b16 %v97
    %v244 = vunpack.c.h.b16 %v97
    %v245 = vunpack.c.l.b16 %v98
    %v246 = vunpack.c.l.b16 %v99
    %v247 = vunpack.c.h.b16 %v99
    %v248 = vunpack.c.l.b16 %v100
    %v249 = vunpack.c.l.b16 %v101
    %v250 = vunpack.c.h.b16 %v101
    %v251 = vunpack.c.l.b16 %v102
    %v252 = vunpack.c.l.b16 %v103
    %v253 = vunpack.c.h.b16 %v103
    %v254 = vunpack.c.l.b16 %v104
    %v255 = vunpack.c.l.b16 %v105
    %v256 = vunpack.c.h.b16 %v105
    %v257 = vunpack.c.l.b16 %v106
    %v258 = vunpack.c.l.b16 %v107
    %v259 = vunpack.c.h.b16 %v107
    %v260 = vunpack.c.l.b16 %v108
    %v261 = vunpack.c.l.b16 %v109
    %v262 = vunpack.c.h.b16 %v109
    %v263 = vunpack.c.l.b16 %v110
    %v264 = vunpack.c.l.b16 %v111
    %v265 = vunpack.c.h.b16 %v111
    %v266 = vunpack.c.l.b16 %v112
    %v267 = vunpack.c.l.b16 %v113
    %v268 = vunpack.c.h.b16 %v113
    %v269 = vunpack.c.l.b16 %v114
    %v270 = vunpack.c.l.b16 %v115
    %v271 = vunpack.c.h.b16 %v115
    %v272 = vunpack.c.l.b16 %v116
    %v273 = vunpack.c.l.b16 %v117
    %v274 = vunpack.c.h.b16 %v117
    %v275 = vunpack.c.l.b16 %v118
    %v276 = vunpack.c.l.b16 %v119
    %v277 = vunpack.c.h.b16 %v119
    %v278 = vunpack.c.l.b16 %v120
    %v279 = vunpack.c.l.b16 %v121
    %v280 = vunpack.c.h.b16 %v121
    %v281 = vunpack.c.l.b16 %v122
    %v282 = vunpack.c.l.b16 %v123
    %v283 = vunpack.c.h.b16 %v123
    %v284 = vunpack.c.l.b16 %v124
    %v285 = vpack.c.b16 %v192, %v189
    %v286 = vpack.c.b16 %v193, %v190
    %v287 = vpack.c.b16 %v194, %v191
    %v288 = vpack.c.b16 %v198, %v195
    %v289 = vpack.c.b16 %v199, %v196
    %v290 = vpack.c.b16 %v200, %v197
    %v291 = vpack.c.b16 %v204, %v201
    %v292 = vpack.c.b16 %v205, %v202
    %v293 = vpack.c.b16 %v206, %v203
    %v294 = vpack.c.b16 %v210, %v207
    %v295 = vpack.c.b16 %v211, %v208
    %v296 = vpack.c.b16 %v212, %v209
    %v297 = vpack.c.b16 %v216, %v213
    %v298 = vpack.c.b16 %v217, %v214
    %v299 = vpack.c.b16 %v218, %v215
    %v300 = vpack.c.b16 %v222, %v219
    %v301 = vpack.c.b16 %v223, %v220
    %v302 = vpack.c.b16 %v224, %v221
    %v303 = vpack.c.b16 %v228, %v225
    %v304 = vpack.c.b16 %v229, %v226
    %v305 = vpack.c.b16 %v230, %v227
    %v306 = vpack.c.b16 %v234, %v231
    %v307 = vpack.c.b16 %v235, %v232
    %v308 = vpack.c.b16 %v236, %v233
    %v309 = vpack.c.b16 %v240, %v237
    %v310 = vpack.c.b16 %v241, %v238
    %v311 = vpack.c.b16 %v242, %v239
    %v312 = vpack.c.b16 %v246, %v243
    %v313 = vpack.c.b16 %v247, %v244
    %v314 = vpack.c.b16 %v248, %v245
    %v315 = vpack.c.b16 %v252, %v249
    %v316 = vpack.c.b16 %v253, %v250
    %v317 = vpack.c.b16 %v254, %v251
    %v318 = vpack.c.b16 %v258, %v255
    %v319 = vpack.c.b16 %v259, %v256
    %v320 = vpack.c.b16 %v260, %v257
    %v321 = vpack.c.b16 %v264, %v261
    %v322 = vpack.c.b16 %v265, %v262
    %v323 = vpack.c.b16 %v266, %v263
    %v324 = vpack.c.b16 %v270, %v267
    %v325 = vpack.c.b16 %v271, %v268
    %v326 = vpack.c.b16 %v272, %v269
    %v327 = vpack.c.b16 %v276, %v273
    %v328 = vpack.c.b16 %v277, %v274
    %v329 = vpack.c.b16 %v278, %v275
    %v330 = vpack.c.b16 %v282, %v279
    %v331 = vpack.c.b16 %v283, %v280
    %v332 = vpack.c.b16 %v284, %v281
    %381 = vmatprep.subr.bf16.mxu0 %v286
    %382 = vmatpush1.bf16.msra.mxu0 %v285
    %383 = vmatprep.subr.bf16.mxu0 %v289
    %384 = vmatpush1.bf16.msra.mxu0 %v288
    %385 = vmatprep.subr.bf16.mxu0 %v292
    %386 = vmatpush1.bf16.msra.mxu0 %v291
    %387 = vmatprep.subr.bf16.mxu0 %v295
    %388 = vmatpush1.bf16.msra.mxu0 %v294
    %389 = vmatprep.subr.bf16.mxu0 %v298
    %390 = vmatpush1.bf16.msra.mxu0 %v297
    %391 = vmatprep.subr.bf16.mxu0 %v301
    %392 = vmatpush1.bf16.msra.mxu0 %v300
    %393 = vmatprep.subr.bf16.mxu0 %v304
    %394 = vmatpush1.bf16.msra.mxu0 %v303
    %395 = vmatprep.subr.bf16.mxu0 %v307
    %396 = vmatpush1.bf16.msra.mxu0 %v306
    %397 = vmatprep.subr.bf16.mxu0 %v310
    %398 = vmatpush1.bf16.msra.mxu0 %v309
    %399 = vmatprep.subr.bf16.mxu0 %v313
    %400 = vmatpush1.bf16.msra.mxu0 %v312
    %401 = vmatprep.subr.bf16.mxu0 %v316
    %402 = vmatpush1.bf16.msra.mxu0 %v315
    %403 = vmatprep.subr.bf16.mxu0 %v319
    %404 = vmatpush1.bf16.msra.mxu0 %v318
    %405 = vmatprep.subr.bf16.mxu0 %v322
    %406 = vmatpush1.bf16.msra.mxu0 %v321
    %407 = vmatprep.subr.bf16.mxu0 %v325
    %408 = vmatpush1.bf16.msra.mxu0 %v324
    %409 = vmatprep.subr.bf16.mxu0 %v328
    %410 = vmatpush1.bf16.msra.mxu0 %v327
    %411 = vmatprep.subr.bf16.mxu0 %v331
    %412 = vmatpush1.bf16.msra.mxu0 %v330
    %413 = vmatprep.mubr.bf16.mxu0 %v60
    %414 = vmatmul.mubr.bf16.gmra.mrb[0].mxu0 %v59
    %v415 = vpop.f32.mrb[0].mxu0
    %v416 = vadd.f32 0.0, %v415
    %v417 = vpop.f32.mrb[0].mxu0
    %v418 = vadd.f32 0.0, %v417
    %v419 = vpop.f32.mrb[0].mxu0
    %v420 = vpop.f32.mrb[0].mxu0
    %421 = vdwg.mxu0
    %422 = vmatprep.subr.bf16.mxu0 0
    %423 = vmatpush1.bf16.msra.mxu0 %v287
    %424 = vmatprep.subr.bf16.mxu0 0
    %425 = vmatpush1.bf16.msra.mxu0 %v290
    %426 = vmatprep.subr.bf16.mxu0 0
    %427 = vmatpush1.bf16.msra.mxu0 %v293
    %428 = vmatprep.subr.bf16.mxu0 0
    %429 = vmatpush1.bf16.msra.mxu0 %v296
    %430 = vmatprep.subr.bf16.mxu0 0
    %431 = vmatpush1.bf16.msra.mxu0 %v299
    %432 = vmatprep.subr.bf16.mxu0 0
    %433 = vmatpush1.bf16.msra.mxu0 %v302
    %434 = vmatprep.subr.bf16.mxu0 0
    %435 = vmatpush1.bf16.msra.mxu0 %v305
    %436 = vmatprep.subr.bf16.mxu0 0
    %437 = vmatpush1.bf16.msra.mxu0 %v308
    %438 = vmatprep.subr.bf16.mxu0 0
    %439 = vmatpush1.bf16.msra.mxu0 %v311
    %440 = vmatprep.subr.bf16.mxu0 0
    %441 = vmatpush1.bf16.msra.mxu0 %v314
    %442 = vmatprep.subr.bf16.mxu0 0
    %443 = vmatpush1.bf16.msra.mxu0 %v317
    %444 = vmatprep.subr.bf16.mxu0 0
    %445 = vmatpush1.bf16.msra.mxu0 %v320
    %446 = vmatprep.subr.bf16.mxu0 0
    %447 = vmatpush1.bf16.msra.mxu0 %v323
    %448 = vmatprep.subr.bf16.mxu0 0
    %449 = vmatpush1.bf16.msra.mxu0 %v326
    %450 = vmatprep.subr.bf16.mxu0 0
    %451 = vmatpush1.bf16.msra.mxu0 %v329
    %452 = vmatprep.subr.bf16.mxu0 0
    %453 = vmatpush1.bf16.msra.mxu0 %v332
    %454 = vmatprep.mubr.bf16.mxu0 %v60
    %455 = vmatmul.mubr.bf16.gmra.mrb[0].mxu0 %v59
    %v456 = vpop.f32.mrb[0].mxu0
    %v457 = vadd.f32 0.0, %v456
    %v458 = vpop.f32.mrb[0].mxu0
    %v459 = vpop.f32.mrb[0].mxu0
    %v460 = vpop.f32.mrb[0].mxu0
    %461 = vdwg.mxu0
    %v462 = vand.u32 2147483647, %v416
    %v463 = vand.u32 2147483647, %v418
    %v464 = vand.u32 2147483647, %v457
    %v465 = vadd.f32 %v462, 0.0
    %v466 = vadd.f32 %v463, 0.0
    %v467 = vadd.f32 %v464, 0.0
    %468 = vst [vmem:[#allocation8] sm:$0xff] %v465
    %469 = vst [vmem:[#allocation8 + $0x8] sm:$0xff] %v466
    %470 = vst [vmem:[#allocation8 + $0x10] sm:$0xff] %v467
    // Predicated region
    $region26: #{tpu_custom_call.1} parent=1 // pred_check
      _
    $region27: #{tpu_custom_call.1} parent=1 // pred_check_branch
      %472 = sbr.rel (0) target = $region29
    $region28: #{tpu_custom_call.1} parent=1 // pred_region
      %s474 = ssub.s32 384, 384
      %475 = vsyncadd [#allocation4], %s474
      %s477 = sshll.u32 [#allocation8], 4
      %s478 = int_to_ptr.vmem [resolvable:$true] %s477
      %480 = dma.vmem_to_hbm [thread:$0]  %s478, 384, %s3, [#allocation4]
    $region29: #{tpu_custom_call.1} parent=1 // pred_fallthru
      _
    // Predicated region
    $region30: #{tpu_custom_call.1} parent=1 // pred_check
      _
    $region31: #{tpu_custom_call.1} parent=1 // pred_check_branch
      %482 = sbr.rel (0) target = $region33
    $region32: #{tpu_custom_call.1} parent=1 // pred_region
      %483 = dma.done [#allocation4], 384
    $region33: #{tpu_custom_call.1} parent=1 // pred_fallthru
      _
    %484 = vsyncpa [#allocation3], 1
    %485 = vsyncpa [#allocation6], 1
    %486 = vsyncpa [#allocation4], 1

// kernel: tpu_custom_call.1
$region0: #{tpu_custom_call.1}
  #allocation0 [shape = 'u32[]', space=smem, size = 0x4, offset = 0x4, fixed_abs, tag = 'smem constant byte address 0x4 - core index']
  #allocation1 [shape = 'u32[144,128]{1,0:T(1,128)}', space=vmem, size = 0x12000, scoped, tag = 'internal scratch']
  %s0 = inlined_call_operand.hbm [shape: f32[8,256], index: 0, kind: input, shape index: {}]
  %s1 = inlined_call_operand.hbm [shape: f32[8,256], index: 1, kind: input, shape index: {}]
  %s2 = inlined_call_operand.hbm [shape: bf16[256,384], index: 2, kind: input, shape index: {}]
  %s3 = inlined_call_operand.hbm [shape: f32[8,384], index: 3, kind: output, shape index: {}]
  %s4 = sld [smem:[#allocation0]]
  $region34: #{tpu_custom_call.1} parent=0
    _
  %s6 = ssub.s32 1, %s4
  %s7 = scalar_select 0, %s6, %s4
  $region1: #{tpu_custom_call.1} parent=0
    #allocation2 [shape = 'u8[8192]{0}', space=vmem, size = 0x2000, scoped, tag = 'input window, operand 0, single buffered']
    #allocation3 [shape = 's32[1]{0}', space=sflag, size = 0x4, scoped, tag = 'scoped memory for tpu_custom_call.1']
    #allocation4 [shape = 's32[1]{0}', space=sflag, size = 0x4, scoped, tag = 'scoped memory for tpu_custom_call.1']
    #allocation5 [shape = 'u8[8192]{0}', space=vmem, size = 0x2000, scoped, tag = 'input window, operand 1, single buffered']
    #allocation6 [shape = 's32[1]{0}', space=sflag, size = 0x4, scoped, tag = 'scoped memory for tpu_custom_call.1']
    #allocation7 [shape = 'u8[196608]{0}', space=vmem, size = 0x30000, scoped, tag = 'input window, operand 2, single buffered']
    #allocation8 [shape = 'u8[12288]{0}', space=vmem, size = 0x3000, scoped, tag = 'output window, operand 0, single buffered']
    %8 = vsyncpa [#allocation3], 0
    %9 = vsyncpa [#allocation6], 0
    %10 = vsyncpa [#allocation4], 0
    // Predicated region
    $region2: #{tpu_custom_call.1} parent=1 // pred_check
      _
    $region3: #{tpu_custom_call.1} parent=1 // pred_check_branch
      %12 = sbr.rel (0) target = $region5
    $region4: #{tpu_custom_call.1} parent=1 // pred_region
      %s14 = ssub.s32 256, 256
      %15 = vsyncadd [#allocation3], %s14
      %s17 = sshll.u32 [#allocation2], 4
      %s18 = int_to_ptr.vmem [resolvable:$true] %s17
      %20 = dma.hbm_to_vmem [thread:$0]  %s0, 256, %s18, [#allocation3]
    $region5: #{tpu_custom_call.1} parent=1 // pred_fallthru
      _
    // Predicated region
    $region6: #{tpu_custom_call.1} parent=1 // pred_check
      _
    $region7: #{tpu_custom_call.1} parent=1 // pred_check_branch
      %22 = sbr.rel (0) target = $region9
    $region8: #{tpu_custom_call.1} parent=1 // pred_region
      %s24 = ssub.s32 256, 256
      %25 = vsyncadd [#allocation6], %s24
      %s27 = sshll.u32 [#allocation5], 4
      %s28 = int_to_ptr.vmem [resolvable:$true] %s27
      %30 = dma.hbm_to_vmem [thread:$0]  %s1, 256, %s28, [#allocation6]
    $region9: #{tpu_custom_call.1} parent=1 // pred_fallthru
      _
    // Predicated region
    $region10: #{tpu_custom_call.1} parent=1 // pred_check
      _
    $region11: #{tpu_custom_call.1} parent=1 // pred_check_branch
      %32 = sbr.rel (0) target = $region13
    $region12: #{tpu_custom_call.1} parent=1 // pred_region
      %s34 = ssub.s32 6144, 6144
      %35 = vsyncadd [#allocation6], %s34
      %s36 = sshll.u32 [#allocation7], 4
      %s37 = int_to_ptr.vmem [resolvable:$true] %s36
      %42 = dma.hbm_to_vmem [thread:$0]  %s2, 6144, %s37, [#allocation6], 192, 192, 12
    $region13: #{tpu_custom_call.1} parent=1 // pred_fallthru
      _
    // Predicated region
    $region14: #{tpu_custom_call.1} parent=1 // pred_check
      _
    $region15: #{tpu_custom_call.1} parent=1 // pred_check_branch
      %44 = sbr.rel (0) target = $region17
    $region16: #{tpu_custom_call.1} parent=1 // pred_region
      %45 = dma.done [#allocation3], 256
    $region17: #{tpu_custom_call.1} parent=1 // pred_fallthru
      _
    // Predicated region
    $region18: #{tpu_custom_call.1} parent=1 // pred_check
      _
    $region19: #{tpu_custom_call.1} parent=1 // pred_check_branch
      %47 = sbr.rel (0) target = $region21
    $region20: #{tpu_custom_call.1} parent=1 // pred_region
      %48 = dma.done [#allocation6], 256
    $region21: #{tpu_custom_call.1} parent=1 // pred_fallthru
      _
    // Predicated region
    $region22: #{tpu_custom_call.1} parent=1 // pred_check
      _
    $region23: #{tpu_custom_call.1} parent=1 // pred_check_branch
      %50 = sbr.rel (0) target = $region25
    $region24: #{tpu_custom_call.1} parent=1 // pred_region
      %51 = dma.done [#allocation6], 6144
    $region25: #{tpu_custom_call.1} parent=1 // pred_fallthru
      _
    %v53 = vld [vmem:[#allocation2] sm:$0xff]
    %v54 = vld [vmem:[#allocation2 + $0x8] sm:$0xff]
    %v55 = vld [vmem:[#allocation5] sm:$0xff]
    %v56 = vld [vmem:[#allocation5 + $0x8] sm:$0xff]
    %v57 = vsub.f32 %v53, %v55
    %v58 = vsub.f32 %v54, %v56
    %v59 = vpack.c.bf16 %v57, %v57
    %v60 = vpack.c.bf16 %v58, %v58
    %v61 = vld [vmem:[#allocation7] sm:$0xff]
    %v62 = vld [vmem:[#allocation7 + $0x8] sm:$0xf]
    %v63 = vld [vmem:[#allocation7 + $0xc] sm:$0xff]
    %v64 = vld [vmem:[#allocation7 + $0x14] sm:$0xf]
    %v65 = vld [vmem:[#allocation7 + $0x18] sm:$0xff]
    %v66 = vld [vmem:[#allocation7 + $0x20] sm:$0xf]
    %v67 = vld [vmem:[#allocation7 + $0x24] sm:$0xff]
    %v68 = vld [vmem:[#allocation7 + $0x2c] sm:$0xf]
    %v69 = vld [vmem:[#allocation7 + $0x30] sm:$0xff]
    %v70 = vld [vmem:[#allocation7 + $0x38] sm:$0xf]
    %v71 = vld [vmem:[#allocation7 + $0x3c] sm:$0xff]
    %v72 = vld [vmem:[#allocation7 + $0x44] sm:$0xf]
    %v73 = vld [vmem:[#allocation7 + $0x48] sm:$0xff]
    %v74 = vld [vmem:[#allocation7 + $0x50] sm:$0xf]
    %v75 = vld [vmem:[#allocation7 + $0x54] sm:$0xff]
    %v76 = vld [vmem:[#allocation7 + $0x5c] sm:$0xf]
    %v77 = vld [vmem:[#allocation7 + $0x60] sm:$0xff]
    %v78 = vld [vmem:[#allocation7 + $0x68] sm:$0xf]
    %v79 = vld [vmem:[#allocation7 + $0x6c] sm:$0xff]
    %v80 = vld [vmem:[#allocation7 + $0x74] sm:$0xf]
    %v81 = vld [vmem:[#allocation7 + $0x78] sm:$0xff]
    %v82 = vld [vmem:[#allocation7 + $0x80] sm:$0xf]
    %v83 = vld [vmem:[#allocation7 + $0x84] sm:$0xff]
    %v84 = vld [vmem:[#allocation7 + $0x8c] sm:$0xf]
    %v85 = vld [vmem:[#allocation7 + $0x90] sm:$0xff]
    %v86 = vld [vmem:[#allocation7 + $0x98] sm:$0xf]
    %v87 = vld [vmem:[#allocation7 + $0x9c] sm:$0xff]
    %v88 = vld [vmem:[#allocation7 + $0xa4] sm:$0xf]
    %v89 = vld [vmem:[#allocation7 + $0xa8] sm:$0xff]
    %v90 = vld [vmem:[#allocation7 + $0xb0] sm:$0xf]
    %v91 = vld [vmem:[#allocation7 + $0xb4] sm:$0xff]
    %v92 = vld [vmem:[#allocation7 + $0xbc] sm:$0xf]
    %v93 = vld [vmem:[#allocation7 + $0xc0] sm:$0xff]
    %v94 = vld [vmem:[#allocation7 + $0xc8] sm:$0xf]
    %v95 = vld [vmem:[#allocation7 + $0xcc] sm:$0xff]
    %v96 = vld [vmem:[#allocation7 + $0xd4] sm:$0xf]
    %v97 = vld [vmem:[#allocation7 + $0xd8] sm:$0xff]
    %v98 = vld [vmem:[#allocation7 + $0xe0] sm:$0xf]
    %v99 = vld [vmem:[#allocation7 + $0xe4] sm:$0xff]
    %v100 = vld [vmem:[#allocation7 + $0xec] sm:$0xf]
    %v101 = vld [vmem:[#allocation7 + $0xf0] sm:$0xff]
    %v102 = vld [vmem:[#allocation7 + $0xf8] sm:$0xf]
    %v103 = vld [vmem:[#allocation7 + $0xfc] sm:$0xff]
    %v104 = vld [vmem:[#allocation7 + $0x104] sm:$0xf]
    %v105 = vld [vmem:[#allocation7 + $0x108] sm:$0xff]
    %v106 = vld [vmem:[#allocation7 + $0x110] sm:$0xf]
    %v107 = vld [vmem:[#allocation7 + $0x114] sm:$0xff]
    %v108 = vld [vmem:[#allocation7 + $0x11c] sm:$0xf]
    %v109 = vld [vmem:[#allocation7 + $0x120] sm:$0xff]
    %v110 = vld [vmem:[#allocation7 + $0x128] sm:$0xf]
    %v111 = vld [vmem:[#allocation7 + $0x12c] sm:$0xff]
    %v112 = vld [vmem:[#allocation7 + $0x134] sm:$0xf]
    %v113 = vld [vmem:[#allocation7 + $0x138] sm:$0xff]
    %v114 = vld [vmem:[#allocation7 + $0x140] sm:$0xf]
    %v115 = vld [vmem:[#allocation7 + $0x144] sm:$0xff]
    %v116 = vld [vmem:[#allocation7 + $0x14c] sm:$0xf]
    %v117 = vld [vmem:[#allocation7 + $0x150] sm:$0xff]
    %v118 = vld [vmem:[#allocation7 + $0x158] sm:$0xf]
    %v119 = vld [vmem:[#allocation7 + $0x15c] sm:$0xff]
    %v120 = vld [vmem:[#allocation7 + $0x164] sm:$0xf]
    %v121 = vld [vmem:[#allocation7 + $0x168] sm:$0xff]
    %v122 = vld [vmem:[#allocation7 + $0x170] sm:$0xf]
    %v123 = vld [vmem:[#allocation7 + $0x174] sm:$0xff]
    %v124 = vld [vmem:[#allocation7 + $0x17c] sm:$0xf]
    %v189 = vunpack.c.l.b16 %v61
    %v190 = vunpack.c.h.b16 %v61
    %v191 = vunpack.c.l.b16 %v62
    %v192 = vunpack.c.l.b16 %v63
    %v193 = vunpack.c.h.b16 %v63
    %v194 = vunpack.c.l.b16 %v64
    %v195 = vunpack.c.l.b16 %v65
    %v196 = vunpack.c.h.b16 %v65
    %v197 = vunpack.c.l.b16 %v66
    %v198 = vunpack.c.l.b16 %v67
    %v199 = vunpack.c.h.b16 %v67
    %v200 = vunpack.c.l.b16 %v68
    %v201 = vunpack.c.l.b16 %v69
    %v202 = vunpack.c.h.b16 %v69
    %v203 = vunpack.c.l.b16 %v70
    %v204 = vunpack.c.l.b16 %v71
    %v205 = vunpack.c.h.b16 %v71
    %v206 = vunpack.c.l.b16 %v72
    %v207 = vunpack.c.l.b16 %v73
    %v208 = vunpack.c.h.b16 %v73
    %v209 = vunpack.c.l.b16 %v74
    %v210 = vunpack.c.l.b16 %v75
    %v211 = vunpack.c.h.b16 %v75
    %v212 = vunpack.c.l.b16 %v76
    %v213 = vunpack.c.l.b16 %v77
    %v214 = vunpack.c.h.b16 %v77
    %v215 = vunpack.c.l.b16 %v78
    %v216 = vunpack.c.l.b16 %v79
    %v217 = vunpack.c.h.b16 %v79
    %v218 = vunpack.c.l.b16 %v80
    %v219 = vunpack.c.l.b16 %v81
    %v220 = vunpack.c.h.b16 %v81
    %v221 = vunpack.c.l.b16 %v82
    %v222 = vunpack.c.l.b16 %v83
    %v223 = vunpack.c.h.b16 %v83
    %v224 = vunpack.c.l.b16 %v84
    %v225 = vunpack.c.l.b16 %v85
    %v226 = vunpack.c.h.b16 %v85
    %v227 = vunpack.c.l.b16 %v86
    %v228 = vunpack.c.l.b16 %v87
    %v229 = vunpack.c.h.b16 %v87
    %v230 = vunpack.c.l.b16 %v88
    %v231 = vunpack.c.l.b16 %v89
    %v232 = vunpack.c.h.b16 %v89
    %v233 = vunpack.c.l.b16 %v90
    %v234 = vunpack.c.l.b16 %v91
    %v235 = vunpack.c.h.b16 %v91
    %v236 = vunpack.c.l.b16 %v92
    %v237 = vunpack.c.l.b16 %v93
    %v238 = vunpack.c.h.b16 %v93
    %v239 = vunpack.c.l.b16 %v94
    %v240 = vunpack.c.l.b16 %v95
    %v241 = vunpack.c.h.b16 %v95
    %v242 = vunpack.c.l.b16 %v96
    %v243 = vunpack.c.l.b16 %v97
    %v244 = vunpack.c.h.b16 %v97
    %v245 = vunpack.c.l.b16 %v98
    %v246 = vunpack.c.l.b16 %v99
    %v247 = vunpack.c.h.b16 %v99
    %v248 = vunpack.c.l.b16 %v100
    %v249 = vunpack.c.l.b16 %v101
    %v250 = vunpack.c.h.b16 %v101
    %v251 = vunpack.c.l.b16 %v102
    %v252 = vunpack.c.l.b16 %v103
    %v253 = vunpack.c.h.b16 %v103
    %v254 = vunpack.c.l.b16 %v104
    %v255 = vunpack.c.l.b16 %v105
    %v256 = vunpack.c.h.b16 %v105
    %v257 = vunpack.c.l.b16 %v106
    %v258 = vunpack.c.l.b16 %v107
    %v259 = vunpack.c.h.b16 %v107
    %v260 = vunpack.c.l.b16 %v108
    %v261 = vunpack.c.l.b16 %v109
    %v262 = vunpack.c.h.b16 %v109
    %v263 = vunpack.c.l.b16 %v110
    %v264 = vunpack.c.l.b16 %v111
    %v265 = vunpack.c.h.b16 %v111
    %v266 = vunpack.c.l.b16 %v112
    %v267 = vunpack.c.l.b16 %v113
    %v268 = vunpack.c.h.b16 %v113
    %v269 = vunpack.c.l.b16 %v114
    %v270 = vunpack.c.l.b16 %v115
    %v271 = vunpack.c.h.b16 %v115
    %v272 = vunpack.c.l.b16 %v116
    %v273 = vunpack.c.l.b16 %v117
    %v274 = vunpack.c.h.b16 %v117
    %v275 = vunpack.c.l.b16 %v118
    %v276 = vunpack.c.l.b16 %v119
    %v277 = vunpack.c.h.b16 %v119
    %v278 = vunpack.c.l.b16 %v120
    %v279 = vunpack.c.l.b16 %v121
    %v280 = vunpack.c.h.b16 %v121
    %v281 = vunpack.c.l.b16 %v122
    %v282 = vunpack.c.l.b16 %v123
    %v283 = vunpack.c.h.b16 %v123
    %v284 = vunpack.c.l.b16 %v124
    %v285 = vpack.c.b16 %v192, %v189
    %v286 = vpack.c.b16 %v193, %v190
    %v287 = vpack.c.b16 %v194, %v191
    %v288 = vpack.c.b16 %v198, %v195
    %v289 = vpack.c.b16 %v199, %v196
    %v290 = vpack.c.b16 %v200, %v197
    %v291 = vpack.c.b16 %v204, %v201
    %v292 = vpack.c.b16 %v205, %v202
    %v293 = vpack.c.b16 %v206, %v203
    %v294 = vpack.c.b16 %v210, %v207
    %v295 = vpack.c.b16 %v211, %v208
    %v296 = vpack.c.b16 %v212, %v209
    %v297 = vpack.c.b16 %v216, %v213
    %v298 = vpack.c.b16 %v217, %v214
    %v299 = vpack.c.b16 %v218, %v215
    %v300 = vpack.c.b16 %v222, %v219
    %v301 = vpack.c.b16 %v223, %v220
    %v302 = vpack.c.b16 %v224, %v221
    %v303 = vpack.c.b16 %v228, %v225
    %v304 = vpack.c.b16 %v229, %v226
    %v305 = vpack.c.b16 %v230, %v227
    %v306 = vpack.c.b16 %v234, %v231
    %v307 = vpack.c.b16 %v235, %v232
    %v308 = vpack.c.b16 %v236, %v233
    %v309 = vpack.c.b16 %v240, %v237
    %v310 = vpack.c.b16 %v241, %v238
    %v311 = vpack.c.b16 %v242, %v239
    %v312 = vpack.c.b16 %v246, %v243
    %v313 = vpack.c.b16 %v247, %v244
    %v314 = vpack.c.b16 %v248, %v245
    %v315 = vpack.c.b16 %v252, %v249
    %v316 = vpack.c.b16 %v253, %v250
    %v317 = vpack.c.b16 %v254, %v251
    %v318 = vpack.c.b16 %v258, %v255
    %v319 = vpack.c.b16 %v259, %v256
    %v320 = vpack.c.b16 %v260, %v257
    %v321 = vpack.c.b16 %v264, %v261
    %v322 = vpack.c.b16 %v265, %v262
    %v323 = vpack.c.b16 %v266, %v263
    %v324 = vpack.c.b16 %v270, %v267
    %v325 = vpack.c.b16 %v271, %v268
    %v326 = vpack.c.b16 %v272, %v269
    %v327 = vpack.c.b16 %v276, %v273
    %v328 = vpack.c.b16 %v277, %v274
    %v329 = vpack.c.b16 %v278, %v275
    %v330 = vpack.c.b16 %v282, %v279
    %v331 = vpack.c.b16 %v283, %v280
    %v332 = vpack.c.b16 %v284, %v281
    %381 = vmatprep.subr.bf16.mxu0 %v286
    %382 = vmatpush1.bf16.msra.mxu0 %v285
    %383 = vmatprep.subr.bf16.mxu0 %v289
    %384 = vmatpush1.bf16.msra.mxu0 %v288
    %385 = vmatprep.subr.bf16.mxu0 %v292
    %386 = vmatpush1.bf16.msra.mxu0 %v291
    %387 = vmatprep.subr.bf16.mxu0 %v295
    %388 = vmatpush1.bf16.msra.mxu0 %v294
    %389 = vmatprep.subr.bf16.mxu0 %v298
    %390 = vmatpush1.bf16.msra.mxu0 %v297
    %391 = vmatprep.subr.bf16.mxu0 %v301
    %392 = vmatpush1.bf16.msra.mxu0 %v300
    %393 = vmatprep.subr.bf16.mxu0 %v304
    %394 = vmatpush1.bf16.msra.mxu0 %v303
    %395 = vmatprep.subr.bf16.mxu0 %v307
    %396 = vmatpush1.bf16.msra.mxu0 %v306
    %397 = vmatprep.subr.bf16.mxu0 %v310
    %398 = vmatpush1.bf16.msra.mxu0 %v309
    %399 = vmatprep.subr.bf16.mxu0 %v313
    %400 = vmatpush1.bf16.msra.mxu0 %v312
    %401 = vmatprep.subr.bf16.mxu0 %v316
    %402 = vmatpush1.bf16.msra.mxu0 %v315
    %403 = vmatprep.subr.bf16.mxu0 %v319
    %404 = vmatpush1.bf16.msra.mxu0 %v318
    %405 = vmatprep.subr.bf16.mxu0 %v322
    %406 = vmatpush1.bf16.msra.mxu0 %v321
    %407 = vmatprep.subr.bf16.mxu0 %v325
    %408 = vmatpush1.bf16.msra.mxu0 %v324
    %409 = vmatprep.subr.bf16.mxu0 %v328
    %410 = vmatpush1.bf16.msra.mxu0 %v327
    %411 = vmatprep.subr.bf16.mxu0 %v331
    %412 = vmatpush1.bf16.msra.mxu0 %v330
    %413 = vmatprep.mubr.bf16.mxu0 %v60
    %414 = vmatmul.mubr.bf16.gmra.mrb[0].mxu0 %v59
    %v415 = vpop.f32.mrb[0].mxu0
    %v416 = vadd.f32 0.0, %v415
    %v417 = vpop.f32.mrb[0].mxu0
    %v418 = vadd.f32 0.0, %v417
    %v419 = vpop.f32.mrb[0].mxu0
    %v420 = vpop.f32.mrb[0].mxu0
    %421 = vdwg.mxu0
    %422 = vmatprep.subr.bf16.mxu0 0
    %423 = vmatpush1.bf16.msra.mxu0 %v287
    %424 = vmatprep.subr.bf16.mxu0 0
    %425 = vmatpush1.bf16.msra.mxu0 %v290
    %426 = vmatprep.subr.bf16.mxu0 0
    %427 = vmatpush1.bf16.msra.mxu0 %v293
    %428 = vmatprep.subr.bf16.mxu0 0
    %429 = vmatpush1.bf16.msra.mxu0 %v296
    %430 = vmatprep.subr.bf16.mxu0 0
    %431 = vmatpush1.bf16.msra.mxu0 %v299
    %432 = vmatprep.subr.bf16.mxu0 0
    %433 = vmatpush1.bf16.msra.mxu0 %v302
    %434 = vmatprep.subr.bf16.mxu0 0
    %435 = vmatpush1.bf16.msra.mxu0 %v305
    %436 = vmatprep.subr.bf16.mxu0 0
    %437 = vmatpush1.bf16.msra.mxu0 %v308
    %438 = vmatprep.subr.bf16.mxu0 0
    %439 = vmatpush1.bf16.msra.mxu0 %v311
    %440 = vmatprep.subr.bf16.mxu0 0
    %441 = vmatpush1.bf16.msra.mxu0 %v314
    %442 = vmatprep.subr.bf16.mxu0 0
    %443 = vmatpush1.bf16.msra.mxu0 %v317
    %444 = vmatprep.subr.bf16.mxu0 0
    %445 = vmatpush1.bf16.msra.mxu0 %v320
    %446 = vmatprep.subr.bf16.mxu0 0
    %447 = vmatpush1.bf16.msra.mxu0 %v323
    %448 = vmatprep.subr.bf16.mxu0 0
    %449 = vmatpush1.bf16.msra.mxu0 %v326
    %450 = vmatprep.subr.bf16.mxu0 0
    %451 = vmatpush1.bf16.msra.mxu0 %v329
    %452 = vmatprep.subr.bf16.mxu0 0
    %453 = vmatpush1.bf16.msra.mxu0 %v332
    %454 = vmatprep.mubr.bf16.mxu0 %v60
    %455 = vmatmul.mubr.bf16.gmra.mrb[0].mxu0 %v59
    %v456 = vpop.f32.mrb[0].mxu0
    %v457 = vadd.f32 0.0, %v456
    %v458 = vpop.f32.mrb[0].mxu0
    %v459 = vpop.f32.mrb[0].mxu0
    %v460 = vpop.f32.mrb[0].mxu0
    %461 = vdwg.mxu0
    %v462 = vand.u32 2147483647, %v416
    %v463 = vand.u32 2147483647, %v418
    %v464 = vand.u32 2147483647, %v457
    %v465 = vadd.f32 %v462, 0.0
    %v466 = vadd.f32 %v463, 0.0
    %v467 = vadd.f32 %v464, 0.0
    %468 = vst [vmem:[#allocation8] sm:$0xff] %v465
    %469 = vst [vmem:[#allocation8 + $0x8] sm:$0xff] %v466
    %470 = vst [vmem:[#allocation8 + $0x10] sm:$0xff] %v467
    // Predicated region
    $region26: #{tpu_custom_call.1} parent=1 // pred_check
      _
    $region27: #{tpu_custom_call.1} parent=1 // pred_check_branch
      %472 = sbr.rel (0) target = $region29
    $region28: #{tpu_custom_call.1} parent=1 // pred_region
      %s474 = ssub.s32 384, 384
      %475 = vsyncadd [#allocation4], %s474
      %s477 = sshll.u32 [#allocation8], 4
      %s478 = int_to_ptr.vmem [resolvable:$true] %s477
      %480 = dma.vmem_to_hbm [thread:$0]  %s478, 384, %s3, [#allocation4]
    $region29: #{tpu_custom_call.1} parent=1 // pred_fallthru
      _
    // Predicated region
    $region30: #{tpu_custom_call.1} parent=1 // pred_check
      _
    $region31: #{tpu_custom_call.1} parent=1 // pred_check_branch
      %482 = sbr.rel (0) target = $region33
    $region32: #{tpu_custom_call.1} parent=1 // pred_region
      %483 = dma.done [#allocation4], 384
    $region33: #{tpu_custom_call.1} parent=1 // pred_fallthru
      _
    %484 = vsyncpa [#allocation3], 1
    %485 = vsyncpa [#allocation6], 1
    %486 = vsyncpa [#allocation4], 1

</llo_original>
